<compile_context>
chip_gen: v5e
topology: v5e:2x2
jax: 0.10.0
libtpu: 0.0.40
codegen_flags: <defaults>
</compile_context>

<pallas_src>
import functools

import jax
import jax.numpy as jnp
from jax import lax
from jax.experimental import pallas as pl
from jax.experimental.pallas import tpu as pltpu


def _temporal_block_kernel(x_ref, wc_ref, bc_ref, w2_ref, b2_ref, out_ref,
                           *, C_IN, C_OUT, B, L, K, DIL):
    # x_ref  : (C_IN, B*L)          batch folded into lanes (b-major, t-minor)
    # wc_ref : (2*C_OUT, K*C_IN)    rows [0:C_OUT]  = conv1 im2col weights,
    #                               rows [C_OUT: ]  = 1x1 downsample placed on
    #                                                 the shift-0 tap columns
    # bc_ref : (2*C_OUT, 1)         [b1 ; bd]
    # w2_ref : (C_OUT, K*C_OUT)     conv2 im2col weights
    # b2_ref : (C_OUT, 1)
    # out_ref: (C_OUT, B*L)
    N = B * L
    x = x_ref[...]                                              # (C_IN, N) f32

    # Time index within each batch's contiguous length-L lane block.
    # Hoisted: broadcasts are not CSE'd by JAX, so build once per row-shape.
    t_in = lax.broadcasted_iota(jnp.int32, (C_IN, N), 1) % L
    t_h = lax.broadcasted_iota(jnp.int32, (C_OUT, N), 1) % L

    def causal_shift(v, t_idx, s):
        """Per-batch right shift by s lanes with zero fill (== causal pad + chomp)."""
        if s == 0:
            return v
        if s >= L:                       # every valid input position is masked
            return jnp.zeros_like(v)
        rows = v.shape[0]
        shifted = jnp.concatenate(
            [jnp.zeros((rows, s), v.dtype), v[:, :N - s]], axis=1)
        # Zero the first s time steps of every batch block (kills cross-batch leak).
        return jnp.where(t_idx < s, 0.0, shifted)

    def im2col(v, t_idx):
        # Stack the K dilated taps along the sublane (contraction) axis,
        # tap-major to match the wrapper-side weight reshape. Tap k uses
        # x[t - (K-1-k)*DIL]; the last tap (k = K-1) is v itself (shift 0).
        return jnp.concatenate(
            [causal_shift(v, t_idx, (K - 1 - k) * DIL) for k in range(K)],
            axis=0)

    # ---- conv1 (causal, dilated) + 1x1 downsample: ONE fused MXU matmul -----
    xi = im2col(x, t_in)                                        # (K*C_IN, N)
    hr = jnp.dot(wc_ref[...], xi,
                 preferred_element_type=jnp.float32) + bc_ref[...]   # (2*C_OUT, N)
    h = jnp.maximum(hr[:C_OUT], 0.0)                            # relu(conv1)
    res = hr[C_OUT:]                                            # downsample(x)
    # dropout1: identity (eval mode)

    # ---- conv2 (causal, dilated) + bias + ReLU: one MXU matmul --------------
    o = jnp.dot(w2_ref[...], im2col(h, t_h),
                preferred_element_type=jnp.float32)             # (C_OUT, N)
    o = jnp.maximum(o + b2_ref[...], 0.0)
    # dropout2: identity (eval mode)

    # ---- residual add + final ReLU ------------------------------------------
    out_ref[...] = jnp.maximum(o + res, 0.0).astype(out_ref.dtype)


def temporal_block(x, w1, b1, w2, b2, wd, bd, *, kernel_size, dilation):
    """TemporalBlock forward (eval mode).

    x : (B, C_in, L) f32
    w1: (C_out, C_in, K), w2: (C_out, C_out, K)  (weight_norm already applied)
    wd: (C_out, C_in) or None (None => identity residual, requires C_in==C_out)
    b1/b2/bd: (C_out,)
    returns (B, C_out, L) f32
    """
    B, C_IN, L = x.shape
    C_OUT = w1.shape[0]
    K = kernel_size
    N = B * L

    # Layout plumbing in plain XLA (cheap, one-time): fold batch into lanes,
    # reshape conv weights to im2col layout, and fuse the 1x1 downsample into
    # the conv1 weight matrix (it reads the shift-0 tap columns of im2col(x)).
    x2d = jnp.transpose(x, (1, 0, 2)).reshape(C_IN, N)
    w1m = jnp.transpose(w1, (0, 2, 1)).reshape(C_OUT, K * C_IN)
    w2m = jnp.transpose(w2, (0, 2, 1)).reshape(C_OUT, K * C_OUT)

    if wd is None:  # PyTorch: downsample is None when n_inputs == n_outputs
        wd = jnp.eye(C_OUT, dtype=x.dtype)
        bd = jnp.zeros((C_OUT,), x.dtype)

    # Downsample weights padded onto the last (shift-0) tap's C_IN columns.
    wdm = jnp.concatenate(
        [jnp.zeros((C_OUT, (K - 1) * C_IN), x.dtype), wd], axis=1)
    wc = jnp.concatenate([w1m, wdm], axis=0)                  # (2*C_OUT, K*C_IN)
    bc = jnp.concatenate([b1, bd]).reshape(2 * C_OUT, 1)

    kernel = functools.partial(_temporal_block_kernel, C_IN=C_IN, C_OUT=C_OUT,
                               B=B, L=L, K=K, DIL=dilation)

    # Everything fits VMEM comfortably at these sizes -> single grid step with
    # full-array blocks (no per-step pipeline overhead, single output store).
    grid_spec = pltpu.PrefetchScalarGridSpec(
        num_scalar_prefetch=0,
        grid=(1,),
        in_specs=[
            pl.BlockSpec((C_IN, N),              lambda i: (0, 0)),  # x (C_in, B*L)
            pl.BlockSpec((2 * C_OUT, K * C_IN),  lambda i: (0, 0)),  # [w1 ; wd] im2col
            pl.BlockSpec((2 * C_OUT, 1),         lambda i: (0, 0)),  # [b1 ; bd]
            pl.BlockSpec((C_OUT, K * C_OUT),     lambda i: (0, 0)),  # w2 im2col
            pl.BlockSpec((C_OUT, 1),             lambda i: (0, 0)),  # b2
        ],
        out_specs=pl.BlockSpec((C_OUT, N), lambda i: (0, 0)),
    )

    out2d = pl.pallas_call(
        kernel,
        out_shape=jax.ShapeDtypeStruct((C_OUT, N), jnp.float32),
        grid_spec=grid_spec,
        compiler_params=pltpu.CompilerParams(dimension_semantics=("arbitrary",)),
    )(x2d, wc, bc, w2m, b2.reshape(C_OUT, 1))

    # Unfold batch from the lane axis.
    return out2d.reshape(C_OUT, B, L).transpose(1, 0, 2)


def _weight_norm(v, g):
    """PyTorch weight_norm (dim=0): w[o] = g[o] * v[o] / ||v[o]||_2."""
    norm = jnp.sqrt(jnp.sum(v * v, axis=(1, 2), keepdims=True))
    return g.reshape(-1, 1, 1) * v / norm


def _reference(x, w1, b1, w2, b2, wd, bd, *, kernel_size, dilation):
    """Pure-JAX reference mirroring the PyTorch forward (eval mode)."""
    PAD = (kernel_size - 1) * dilation
    dn = ("NCH", "OIH", "NCH")

    def conv(inp, w, b):
        y = lax.conv_general_dilated(inp, w, window_strides=(1,),
                                     padding=[(PAD, PAD)], rhs_dilation=(dilation,),
                                     dimension_numbers=dn)
        y = y[:, :, :-PAD]                      # Chomp1d
        return y + b.reshape(1, -1, 1)

    h = jnp.maximum(conv(x, w1, b1), 0.0)
    o = jnp.maximum(conv(h, w2, b2), 0.0)
    res = lax.conv_general_dilated(x, wd[:, :, None], window_strides=(1,),
                                   padding=[(0, 0)], dimension_numbers=dn)
    res = res + bd.reshape(1, -1, 1)
    return jnp.maximum(o + res, 0.0)


if __name__ == "__main__":
    # Module hyperparameters (small, consistent with TemporalBlock.__init__)
    B, C_IN, C_OUT, L = 2, 4, 8, 16
    K, STRIDE, DIL = 3, 1, 2
    PAD = (K - 1) * DIL                          # padding = (kernel_size-1)*dilation

    key = jax.random.PRNGKey(0)
    k_x, k_v1, k_g1, k_b1, k_v2, k_g2, k_b2, k_wd, k_bd = jax.random.split(key, 9)

    x = jax.random.normal(k_x, (B, C_IN, L), jnp.float32)

    # weight_norm(Conv1d) parameters: v (direction), g (magnitude), bias.
    # init_weights sets weights ~ N(0, 0.01); emulate deterministically.
    v1 = 0.01 * jax.random.normal(k_v1, (C_OUT, C_IN, K), jnp.float32)
    g1 = 1.0 + 0.1 * jax.random.normal(k_g1, (C_OUT,), jnp.float32)
    b1 = 0.05 * jax.random.normal(k_b1, (C_OUT,), jnp.float32)
    v2 = 0.01 * jax.random.normal(k_v2, (C_OUT, C_OUT, K), jnp.float32)
    g2 = 1.0 + 0.1 * jax.random.normal(k_g2, (C_OUT,), jnp.float32)
    b2 = 0.05 * jax.random.normal(k_b2, (C_OUT,), jnp.float32)
    # downsample 1x1 conv (n_inputs != n_outputs here), weight ~ N(0, 0.01)
    wd = 0.01 * jax.random.normal(k_wd, (C_OUT, C_IN), jnp.float32)
    bd = 0.05 * jax.random.normal(k_bd, (C_OUT,), jnp.float32)

    # Effective (weight-normalized) conv weights — parameter setup glue.
    w1 = _weight_norm(v1, g1)
    w2 = _weight_norm(v2, g2)

    out = temporal_block(x, w1, b1, w2, b2, wd, bd, kernel_size=K, dilation=DIL)
    out = jax.block_until_ready(out)

    ref = _reference(x, w1, b1, w2, b2, wd, bd, kernel_size=K, dilation=DIL)
    assert out.shape == (B, C_OUT, L)
    assert jnp.allclose(out, ref, atol=1e-5, rtol=1e-5), "mismatch vs JAX reference"

    print("KERNEL_OK")
</pallas_src>

<mosaic_0001>
module attributes {stable_mosaic.version = 11 : i64} {
  func.func @_temporal_block_kernel(%arg0: i32, %arg1: memref<4x32xf32, #tpu.memory_space<vmem>>, %arg2: memref<16x12xf32, #tpu.memory_space<vmem>>, %arg3: memref<16x1xf32, #tpu.memory_space<vmem>>, %arg4: memref<8x24xf32, #tpu.memory_space<vmem>>, %arg5: memref<8x1xf32, #tpu.memory_space<vmem>>, %arg6: memref<8x32xf32, #tpu.memory_space<vmem>>) attributes {dimension_semantics = [#tpu.dimension_semantics<arbitrary>], iteration_bounds = array<i64: 1>, scalar_prefetch = 0 : i64, scratch_operands = 0 : i64, tpu.core_type = #tpu.core_type<tc>, window_params = [{pipeline_mode = #tpu.pipeline_mode<synchronous>, transform_indices = @transform_0, window_bounds = array<i64: 4, 32>}, {pipeline_mode = #tpu.pipeline_mode<synchronous>, transform_indices = @transform_1, window_bounds = array<i64: 16, 12>}, {pipeline_mode = #tpu.pipeline_mode<synchronous>, transform_indices = @transform_2, window_bounds = array<i64: 16, 1>}, {pipeline_mode = #tpu.pipeline_mode<synchronous>, transform_indices = @transform_3, window_bounds = array<i64: 8, 24>}, {pipeline_mode = #tpu.pipeline_mode<synchronous>, transform_indices = @transform_4, window_bounds = array<i64: 8, 1>}, {pipeline_mode = #tpu.pipeline_mode<synchronous>, transform_indices = @transform_5, window_bounds = array<i64: 8, 32>}]} {
    %c0 = arith.constant 0 : index
    %c0_0 = arith.constant 0 : index
    %0 = vector.load %arg1[%c0, %c0_0] : memref<4x32xf32, #tpu.memory_space<vmem>>, vector<4x32xf32>
    %1 = tpu.iota {dimensions = array<i32: 1>} : vector<4x32xi32>
    %c16_i32 = arith.constant 16 : i32
    %c0_i32 = arith.constant 0 : i32
    %2 = arith.cmpi eq, %c16_i32, %c0_i32 : i32
    %c1_i32 = arith.constant 1 : i32
    %3 = arith.select %2, %c1_i32, %c16_i32 : i32
    %4 = vector.broadcast %3 : i32 to vector<4x32xi32>
    %5 = arith.remsi %1, %4 : vector<4x32xi32>
    %c0_i32_1 = arith.constant 0 : i32
    %6 = vector.broadcast %c0_i32_1 : i32 to vector<4x32xi32>
    %7 = arith.cmpi ne, %5, %6 : vector<4x32xi32>
    %c0_i32_2 = arith.constant 0 : i32
    %8 = vector.broadcast %c0_i32_2 : i32 to vector<4x32xi32>
    %9 = arith.cmpi slt, %5, %8 : vector<4x32xi32>
    %c0_i32_3 = arith.constant 0 : i32
    %10 = arith.cmpi slt, %3, %c0_i32_3 : i32
    %11 = vector.broadcast %10 : i1 to vector<4x32xi1>
    %12 = vector.broadcast %11 : vector<4x32xi1> to vector<4x32xi1>
    %13 = arith.xori %9, %12 : vector<4x32xi1>
    %14 = arith.andi %13, %7 : vector<4x32xi1>
    %15 = vector.broadcast %3 : i32 to vector<4x32xi32>
    %16 = arith.addi %5, %15 : vector<4x32xi32>
    %17 = arith.select %14, %16, %5 : vector<4x32xi1>, vector<4x32xi32>
    %18 = tpu.iota {dimensions = array<i32: 1>} : vector<8x32xi32>
    %c16_i32_4 = arith.constant 16 : i32
    %c0_i32_5 = arith.constant 0 : i32
    %19 = arith.cmpi eq, %c16_i32_4, %c0_i32_5 : i32
    %c1_i32_6 = arith.constant 1 : i32
    %20 = arith.select %19, %c1_i32_6, %c16_i32_4 : i32
    %21 = vector.broadcast %20 : i32 to vector<8x32xi32>
    %22 = arith.remsi %18, %21 : vector<8x32xi32>
    %c0_i32_7 = arith.constant 0 : i32
    %23 = vector.broadcast %c0_i32_7 : i32 to vector<8x32xi32>
    %24 = arith.cmpi ne, %22, %23 : vector<8x32xi32>
    %c0_i32_8 = arith.constant 0 : i32
    %25 = vector.broadcast %c0_i32_8 : i32 to vector<8x32xi32>
    %26 = arith.cmpi slt, %22, %25 : vector<8x32xi32>
    %c0_i32_9 = arith.constant 0 : i32
    %27 = arith.cmpi slt, %20, %c0_i32_9 : i32
    %28 = vector.broadcast %27 : i1 to vector<8x32xi1>
    %29 = vector.broadcast %28 : vector<8x32xi1> to vector<8x32xi1>
    %30 = arith.xori %26, %29 : vector<8x32xi1>
    %31 = arith.andi %30, %24 : vector<8x32xi1>
    %32 = vector.broadcast %20 : i32 to vector<8x32xi32>
    %33 = arith.addi %22, %32 : vector<8x32xi32>
    %34 = arith.select %31, %33, %22 : vector<8x32xi1>, vector<8x32xi32>
    %cst = arith.constant 0.000000e+00 : f32
    %35 = vector.broadcast %cst : f32 to vector<4x4xf32>
    %36 = vector.extract_strided_slice %0 {offsets = [0, 0], sizes = [4, 28], strides = [1, 1]} : vector<4x32xf32> to vector<4x28xf32>
    %37 = tpu.concatenate %35, %36 in 1 : vector<4x4xf32>, vector<4x28xf32> -> vector<4x32xf32>
    %c4_i32 = arith.constant 4 : i32
    %38 = vector.broadcast %c4_i32 : i32 to vector<4x32xi32>
    %39 = arith.cmpi slt, %17, %38 : vector<4x32xi32>
    %cst_10 = arith.constant 0.000000e+00 : f32
    %40 = vector.broadcast %cst_10 : f32 to vector<4x32xf32>
    %41 = arith.select %39, %40, %37 : vector<4x32xi1>, vector<4x32xf32>
    %cst_11 = arith.constant 0.000000e+00 : f32
    %42 = vector.broadcast %cst_11 : f32 to vector<4x2xf32>
    %43 = vector.extract_strided_slice %0 {offsets = [0, 0], sizes = [4, 30], strides = [1, 1]} : vector<4x32xf32> to vector<4x30xf32>
    %44 = tpu.concatenate %42, %43 in 1 : vector<4x2xf32>, vector<4x30xf32> -> vector<4x32xf32>
    %c2_i32 = arith.constant 2 : i32
    %45 = vector.broadcast %c2_i32 : i32 to vector<4x32xi32>
    %46 = arith.cmpi slt, %17, %45 : vector<4x32xi32>
    %cst_12 = arith.constant 0.000000e+00 : f32
    %47 = vector.broadcast %cst_12 : f32 to vector<4x32xf32>
    %48 = arith.select %46, %47, %44 : vector<4x32xi1>, vector<4x32xf32>
    %49 = tpu.concatenate %41, %48, %0 in 0 : vector<4x32xf32>, vector<4x32xf32>, vector<4x32xf32> -> vector<12x32xf32>
    %c0_13 = arith.constant 0 : index
    %c0_14 = arith.constant 0 : index
    %50 = vector.load %arg2[%c0_13, %c0_14] : memref<16x12xf32, #tpu.memory_space<vmem>>, vector<16x12xf32>
    %cst_15 = arith.constant dense<0.000000e+00> : vector<16x32xf32>
    %51 = tpu.matmul %50, %49, %cst_15 {dimension_numbers = #tpu.dot_dimension_numbers<[1], [0], [0], [1], [0, 0, 1, 1], [], []>} : vector<16x12xf32>, vector<12x32xf32>, vector<16x32xf32> -> vector<16x32xf32>
    %c0_16 = arith.constant 0 : index
    %c0_17 = arith.constant 0 : index
    %52 = vector.load %arg3[%c0_16, %c0_17] : memref<16x1xf32, #tpu.memory_space<vmem>>, vector<16x1xf32>
    %53 = vector.broadcast %52 : vector<16x1xf32> to vector<16x32xf32>
    %54 = arith.addf %51, %53 : vector<16x32xf32>
    %55 = vector.extract_strided_slice %54 {offsets = [0, 0], sizes = [8, 32], strides = [1, 1]} : vector<16x32xf32> to vector<8x32xf32>
    %cst_18 = arith.constant 0.000000e+00 : f32
    %56 = vector.broadcast %cst_18 : f32 to vector<8x32xf32>
    %57 = arith.maximumf %55, %56 : vector<8x32xf32>
    %58 = vector.extract_strided_slice %54 {offsets = [8, 0], sizes = [8, 32], strides = [1, 1]} : vector<16x32xf32> to vector<8x32xf32>
    %c0_19 = arith.constant 0 : index
    %c0_20 = arith.constant 0 : index
    %59 = vector.load %arg4[%c0_19, %c0_20] : memref<8x24xf32, #tpu.memory_space<vmem>>, vector<8x24xf32>
    %cst_21 = arith.constant 0.000000e+00 : f32
    %60 = vector.broadcast %cst_21 : f32 to vector<8x4xf32>
    %61 = vector.extract_strided_slice %57 {offsets = [0, 0], sizes = [8, 28], strides = [1, 1]} : vector<8x32xf32> to vector<8x28xf32>
    %62 = tpu.concatenate %60, %61 in 1 : vector<8x4xf32>, vector<8x28xf32> -> vector<8x32xf32>
    %c4_i32_22 = arith.constant 4 : i32
    %63 = vector.broadcast %c4_i32_22 : i32 to vector<8x32xi32>
    %64 = arith.cmpi slt, %34, %63 : vector<8x32xi32>
    %cst_23 = arith.constant 0.000000e+00 : f32
    %65 = vector.broadcast %cst_23 : f32 to vector<8x32xf32>
    %66 = arith.select %64, %65, %62 : vector<8x32xi1>, vector<8x32xf32>
    %cst_24 = arith.constant 0.000000e+00 : f32
    %67 = vector.broadcast %cst_24 : f32 to vector<8x2xf32>
    %68 = vector.extract_strided_slice %57 {offsets = [0, 0], sizes = [8, 30], strides = [1, 1]} : vector<8x32xf32> to vector<8x30xf32>
    %69 = tpu.concatenate %67, %68 in 1 : vector<8x2xf32>, vector<8x30xf32> -> vector<8x32xf32>
    %c2_i32_25 = arith.constant 2 : i32
    %70 = vector.broadcast %c2_i32_25 : i32 to vector<8x32xi32>
    %71 = arith.cmpi slt, %34, %70 : vector<8x32xi32>
    %cst_26 = arith.constant 0.000000e+00 : f32
    %72 = vector.broadcast %cst_26 : f32 to vector<8x32xf32>
    %73 = arith.select %71, %72, %69 : vector<8x32xi1>, vector<8x32xf32>
    %74 = tpu.concatenate %66, %73, %57 in 0 : vector<8x32xf32>, vector<8x32xf32>, vector<8x32xf32> -> vector<24x32xf32>
    %cst_27 = arith.constant dense<0.000000e+00> : vector<8x32xf32>
    %75 = tpu.matmul %59, %74, %cst_27 {dimension_numbers = #tpu.dot_dimension_numbers<[1], [0], [0], [1], [0, 0, 1, 1], [], []>} : vector<8x24xf32>, vector<24x32xf32>, vector<8x32xf32> -> vector<8x32xf32>
    %c0_28 = arith.constant 0 : index
    %c0_29 = arith.constant 0 : index
    %76 = vector.load %arg5[%c0_28, %c0_29] : memref<8x1xf32, #tpu.memory_space<vmem>>, vector<8x1xf32>
    %77 = vector.broadcast %76 : vector<8x1xf32> to vector<8x32xf32>
    %78 = arith.addf %75, %77 : vector<8x32xf32>
    %cst_30 = arith.constant 0.000000e+00 : f32
    %79 = vector.broadcast %cst_30 : f32 to vector<8x32xf32>
    %80 = arith.maximumf %78, %79 : vector<8x32xf32>
    %81 = arith.addf %80, %58 : vector<8x32xf32>
    %cst_31 = arith.constant 0.000000e+00 : f32
    %82 = vector.broadcast %cst_31 : f32 to vector<8x32xf32>
    %83 = arith.maximumf %81, %82 : vector<8x32xf32>
    %c0_32 = arith.constant 0 : index
    %c0_33 = arith.constant 0 : index
    %84 = vector.load %arg6[%c0_32, %c0_33] : memref<8x32xf32, #tpu.memory_space<vmem>>, vector<8x32xf32>
    tpu.vector_store %arg6[%c0_32, %c0_33], %83 {strides = array<i32>} : memref<8x32xf32, #tpu.memory_space<vmem>>, vector<8x32xf32>,
    return
  }
  func.func @transform_0(%arg0: i32) -> (i32, i32) {
    %c0_i32 = arith.constant 0 : i32
    %c0_i32_0 = arith.constant 0 : i32
    %c0_i32_1 = arith.constant 0 : i32
    return %c0_i32, %c0_i32_0 : i32, i32
  }
  func.func @transform_1(%arg0: i32) -> (i32, i32) {
    %c0_i32 = arith.constant 0 : i32
    %c0_i32_0 = arith.constant 0 : i32
    %c0_i32_1 = arith.constant 0 : i32
    return %c0_i32, %c0_i32_0 : i32, i32
  }
  func.func @transform_2(%arg0: i32) -> (i32, i32) {
    %c0_i32 = arith.constant 0 : i32
    %c0_i32_0 = arith.constant 0 : i32
    %c0_i32_1 = arith.constant 0 : i32
    return %c0_i32, %c0_i32_0 : i32, i32
  }
  func.func @transform_3(%arg0: i32) -> (i32, i32) {
    %c0_i32 = arith.constant 0 : i32
    %c0_i32_0 = arith.constant 0 : i32
    %c0_i32_1 = arith.constant 0 : i32
    return %c0_i32, %c0_i32_0 : i32, i32
  }
  func.func @transform_4(%arg0: i32) -> (i32, i32) {
    %c0_i32 = arith.constant 0 : i32
    %c0_i32_0 = arith.constant 0 : i32
    %c0_i32_1 = arith.constant 0 : i32
    return %c0_i32, %c0_i32_0 : i32, i32
  }
  func.func @transform_5(%arg0: i32) -> (i32, i32) {
    %c0_i32 = arith.constant 0 : i32
    %c0_i32_0 = arith.constant 0 : i32
    %c0_i32_1 = arith.constant 0 : i32
    return %c0_i32, %c0_i32_0 : i32, i32
  }
}

</mosaic_0001>

<llo_original>
// kernel: tpu_custom_call.1
$region0: #{tpu_custom_call.1}
  #allocation0 [shape = 'u32[]', space=smem, size = 0x4, offset = 0x4, fixed_abs, tag = 'smem constant byte address 0x4 - core index']
  #allocation1 [shape = 'u32[72,128]{1,0:T(1,128)}', space=vmem, size = 0x9000, scoped, tag = 'internal scratch']
  %s0 = inlined_call_operand.hbm [shape: f32[4,32], index: 0, kind: input, shape index: {}]
  %s1 = inlined_call_operand.vmem [shape: f32[16,12], index: 1, kind: input, shape index: {}]
  %s2 = inlined_call_operand.vmem [shape: f32[16,1], index: 2, kind: input, shape index: {}]
  %s3 = inlined_call_operand.vmem [shape: f32[8,24], index: 3, kind: input, shape index: {}]
  %s4 = inlined_call_operand.vmem [shape: f32[8,1], index: 4, kind: input, shape index: {}]
  %s5 = inlined_call_operand.hbm [shape: f32[8,32], index: 5, kind: output, shape index: {}]
  %s6 = sld [smem:[#allocation0]]
  $region34: #{tpu_custom_call.1} parent=0
    _
  %s8 = ssub.s32 1, %s6
  %s9 = scalar_select 0, %s8, %s6
  $region1: #{tpu_custom_call.1} parent=0
    #allocation2 [shape = 'u8[2048]{0}', space=vmem, size = 0x800, scoped, tag = 'input window, operand 0, single buffered']
    #allocation3 [shape = 's32[1]{0}', space=sflag, size = 0x4, scoped, tag = 'scoped memory for tpu_custom_call.1']
    #allocation4 [shape = 's32[1]{0}', space=sflag, size = 0x4, scoped, tag = 'scoped memory for tpu_custom_call.1']
    #allocation5 [shape = 'u8[4096]{0}', space=vmem, size = 0x1000, scoped, tag = 'output window, operand 0, single buffered']
    %10 = vsyncpa [#allocation3], 0
    %11 = vsyncpa [#allocation4], 0
    // Predicated region
    $region2: #{tpu_custom_call.1} parent=1 // pred_check
      _
    $region3: #{tpu_custom_call.1} parent=1 // pred_check_branch
      %13 = sbr.rel (0) target = $region5
    $region4: #{tpu_custom_call.1} parent=1 // pred_region
      %15 = vsyncadd [#allocation3], 0
      %s17 = sshll.u32 %s0, 4
      %s18 = int_to_ptr.hbm [resolvable:$true] %s17
      %s19 = sshll.u32 [#allocation2], 4
      %s20 = int_to_ptr.vmem [resolvable:$true] %s19
      %22 = dma.hbm_to_vmem [thread:$0]  %s18, 64, %s20, [#allocation3]
    $region5: #{tpu_custom_call.1} parent=1 // pred_fallthru
      _
    // Predicated region
    $region6: #{tpu_custom_call.1} parent=1 // pred_check
      _
    $region7: #{tpu_custom_call.1} parent=1 // pred_check_branch
      %24 = sbr.rel (0) target = $region9
    $region8: #{tpu_custom_call.1} parent=1 // pred_region
      _
    $region9: #{tpu_custom_call.1} parent=1 // pred_fallthru
      _
    // Predicated region
    $region10: #{tpu_custom_call.1} parent=1 // pred_check
      _
    $region11: #{tpu_custom_call.1} parent=1 // pred_check_branch
      %26 = sbr.rel (0) target = $region13
    $region12: #{tpu_custom_call.1} parent=1 // pred_region
      _
    $region13: #{tpu_custom_call.1} parent=1 // pred_fallthru
      _
    // Predicated region
    $region14: #{tpu_custom_call.1} parent=1 // pred_check
      _
    $region15: #{tpu_custom_call.1} parent=1 // pred_check_branch
      %28 = sbr.rel (0) target = $region17
    $region16: #{tpu_custom_call.1} parent=1 // pred_region
      _
    $region17: #{tpu_custom_call.1} parent=1 // pred_fallthru
      _
    // Predicated region
    $region18: #{tpu_custom_call.1} parent=1 // pred_check
      _
    $region19: #{tpu_custom_call.1} parent=1 // pred_check_branch
      %30 = sbr.rel (0) target = $region21
    $region20: #{tpu_custom_call.1} parent=1 // pred_region
      _
    $region21: #{tpu_custom_call.1} parent=1 // pred_fallthru
      _
    // Predicated region
    $region22: #{tpu_custom_call.1} parent=1 // pred_check
      _
    $region23: #{tpu_custom_call.1} parent=1 // pred_check_branch
      %32 = sbr.rel (0) target = $region25
    $region24: #{tpu_custom_call.1} parent=1 // pred_region
      %34 = dma.done [#allocation3], 64
    $region25: #{tpu_custom_call.1} parent=1 // pred_fallthru
      _
    %v35 = vld [vmem:[#allocation2] sm:$0xf]
    %v36 = vlaneseq
    %v37 = vand.u32 %v36, 127
    %vm38 = vcmp.lt.s32.totalorder %v37, 0
    %v39 = vsub.s32 0, %v37
    %v40 = vsel %vm38, %v39, %v37
    %v41 = vshrl.u32 %v40, 4
    %v42 = vand.u32 %v40, 15
    %v43 = vsub.s32 0, %v42
    %v44 = vsel %vm38, %v43, %v42
    %vm45 = vcmp.ne.s32.totalorder %v44, 0
    %vm46 = vcmp.lt.s32.totalorder %v44, 0
    %vm47 = vmand %vm46, %vm45
    %v48 = vadd.s32 %v44, 16
    %v49 = vsel %vm47, %v48, %v44
    %51 = vrot.lane.b32.xlu0 %v35, 4
    %v52 = vpop.permute.xlu0 %51
    %vm54 = vcmask 31744
    %v55 = vsel %vm54, 0.0, %v52
    %vm56 = vcmp.lt.s32.totalorder %v49, 4
    %v57 = vsel %vm56, 0.0, %v55
    %58 = vrot.lane.b32.xlu0 %v35, 2
    %v59 = vpop.permute.xlu0 %58
    %vm61 = vcmask 15360
    %v62 = vsel %vm61, 0.0, %v59
    %vm63 = vcmp.lt.s32.totalorder %v49, 2
    %v64 = vsel %vm63, 0.0, %v62
    %v66 = vrot.slane %v64, 4
    %vm68 = vcmask 1043456
    %v69 = vsel %vm68, %v57, %v66
    %v70 = vld [vmem:[%s1] sm:$0xff]
    %v71 = vld [vmem:[%s1 + $0x8] sm:$0xff]
    %v72 = vld [vmem:[%s2] sm:$0xff]
    %v73 = vld [vmem:[%s2 + $0x8] sm:$0xff]
    %75 = vset.pattern.permute.xlu0 0
    %76 = vperm.xlu0 %75, %v72
    %v77 = vpop.permute.xlu0 %76
    %80 = vset.pattern.permute.xlu0 0
    %81 = vperm.xlu0 %80, %v73
    %v82 = vpop.permute.xlu0 %81
    %vm84 = vcmask 97280
    %v86 = vsel %vm84, %v70, 0
    %v89 = vsel %vm84, %v71, 0
    %v91 = vsel %vm68, %v35, 0
    %93 = vmatpush.msra.mxu0 0.0
    %94 = vmatpush.msra.mxu0 0.0
    %95 = vmatpush.msra.mxu0 0.0
    %96 = vmatpush.msra.mxu0 0.0
    %97 = vmatpush.msra.mxu0 0.0
    %98 = vmatpush.msra.mxu0 0.0
    %99 = vmatpush.msra.mxu0 0.0
    %100 = vmatpush.msra.mxu0 0.0
    %101 = vmatpush.msra.mxu0 0.0
    %102 = vmatpush.msra.mxu0 0.0
    %103 = vmatpush.msra.mxu0 0.0
    %104 = vmatpush.msra.mxu0 0.0
    %105 = vmatpush.msra.mxu0 0.0
    %106 = vmatpush.msra.mxu0 0.0
    %107 = vmatpush.msra.mxu0 %v91
    %108 = vmatpush.msra.mxu0 %v69
    %109 = vmatmul.f32.gmra.mxu0 %v86
    %v110 = vpop.f32.mrf.mxu0
    %v111 = vadd.f32 %v77, %v110
    %112 = vmatmul.f32.gmra.mxu0 %v89
    %v113 = vpop.f32.mrf.mxu0
    %v114 = vadd.f32 %v82, %v113
    %115 = vdwg.mxu0
    %v116 = vmax.f32 %v111, 0.0
    %v117 = vld [vmem:[%s3] sm:$0xff]
    %119 = vrot.lane.b32.xlu0 %v116, 4
    %v120 = vpop.permute.xlu0 %119
    %v122 = vsel %vm54, 0.0, %v120
    %v123 = vsel %vm56, 0.0, %v122
    %124 = vrot.lane.b32.xlu0 %v116, 2
    %v125 = vpop.permute.xlu0 %124
    %v127 = vsel %vm61, 0.0, %v125
    %v128 = vsel %vm63, 0.0, %v127
    %v129 = vld [vmem:[%s4] sm:$0xff]
    %131 = vset.pattern.permute.xlu0 0
    %132 = vperm.xlu0 %131, %v129
    %v133 = vpop.permute.xlu0 %132
    %vm135 = vcmask 195584
    %v137 = vsel %vm135, %v117, 0
    %139 = vmatpush.msra.mxu0 0.0
    %140 = vmatpush.msra.mxu0 0.0
    %141 = vmatpush.msra.mxu0 0.0
    %142 = vmatpush.msra.mxu0 0.0
    %143 = vmatpush.msra.mxu0 0.0
    %144 = vmatpush.msra.mxu0 0.0
    %145 = vmatpush.msra.mxu0 0.0
    %146 = vmatpush.msra.mxu0 0.0
    %147 = vmatpush.msra.mxu0 0.0
    %148 = vmatpush.msra.mxu0 0.0
    %149 = vmatpush.msra.mxu0 0.0
    %150 = vmatpush.msra.mxu0 0.0
    %151 = vmatpush.msra.mxu0 0.0
    %152 = vmatpush.msra.mxu0 %v116
    %153 = vmatpush.msra.mxu0 %v128
    %154 = vmatpush.msra.mxu0 %v123
    %155 = vmatmul.f32.gmra.mxu0 %v137
    %v156 = vpop.f32.mrf.mxu0
    %v157 = vadd.f32 %v133, %v156
    %158 = vdwg.mxu0
    %v159 = vmax.f32 %v157, 0.0
    %v160 = vadd.f32 %v159, %v114
    %v161 = vmax.f32 %v160, 0.0
    %vm162 = vcmask 261120
    %163 = vst.msk [vmem:[#allocation5] sm:$0xff] %vm162, %v161
    // Predicated region
    $region26: #{tpu_custom_call.1} parent=1 // pred_check
      _
    $region27: #{tpu_custom_call.1} parent=1 // pred_check_branch
      %165 = sbr.rel (0) target = $region29
    $region28: #{tpu_custom_call.1} parent=1 // pred_region
      %167 = vsyncadd [#allocation4], 0
      %s169 = sshll.u32 [#allocation5], 4
      %s170 = int_to_ptr.vmem [resolvable:$true] %s169
      %s171 = sshll.u32 %s5, 4
      %s172 = int_to_ptr.hbm [resolvable:$true] %s171
      %174 = dma.vmem_to_hbm [thread:$0]  %s170, 128, %s172, [#allocation4]
    $region29: #{tpu_custom_call.1} parent=1 // pred_fallthru
      _
    // Predicated region
    $region30: #{tpu_custom_call.1} parent=1 // pred_check
      _
    $region31: #{tpu_custom_call.1} parent=1 // pred_check_branch
      %176 = sbr.rel (0) target = $region33
    $region32: #{tpu_custom_call.1} parent=1 // pred_region
      %178 = dma.done [#allocation4], 128
    $region33: #{tpu_custom_call.1} parent=1 // pred_fallthru
      _
    %179 = vsyncpa [#allocation3], 1
    %180 = vsyncpa [#allocation4], 1

</llo_original>
